<compile_context>
chip_gen: v7x
topology: tpu7x:2x2x1
jax: 0.10.0
libtpu: 0.0.40
codegen_flags: <defaults>
</compile_context>

<pallas_src>
import math

import jax
import jax.numpy as jnp
from jax import lax
from jax.experimental import pallas as pl
from jax.experimental.pallas import tpu as pltpu


def _generator_kernel(x_ref, w_ref, b_ref, o_ref, m_sc, l_sc):
    # x_ref : (tm, d_model)        VMEM, resident across the vocab loop
    # w_ref : (tv, d_model)        VMEM, streamed per vocab tile
    # b_ref : (1,  tv)             VMEM
    # o_ref : (tm, vocab_p) f32    VMEM, resident logits row / final output
    # m_sc  : (tm, 1) f32          running row max
    # l_sc  : (tm, 1) f32          running sum(exp(logits - max))
    j = pl.program_id(1)
    n_v = pl.num_programs(1)
    tv = w_ref.shape[0]

    @pl.when(j == 0)
    def _():
        m_sc[...] = jnp.full_like(m_sc, -jnp.inf)
        l_sc[...] = jnp.zeros_like(l_sc)

    # logits tile = x @ W_tile^T + b_tile : native-dtype operands, f32 MXU acc,
    # contraction on dim 1 of both so no per-tile weight transpose is needed.
    logits = lax.dot_general(
        x_ref[...], w_ref[...],
        dimension_numbers=(((1,), (1,)), ((), ())),
        preferred_element_type=jnp.float32,
    ) + b_ref[...].astype(jnp.float32)

    # Online max / log-sum-exp update (flash-style): per-tile EUP/XLU work
    # hides under the next tile's MXU work instead of a serial tail.
    m_old = m_sc[...]
    m_new = jnp.maximum(m_old, jnp.max(logits, axis=-1, keepdims=True))
    l_sc[...] = (l_sc[...] * jnp.exp(m_old - m_new)
                 + jnp.sum(jnp.exp(logits - m_new), axis=-1, keepdims=True))
    m_sc[...] = m_new

    # Stash the raw logits tile into the resident output row (lane-aligned).
    col = pl.multiple_of(j * tv, tv)
    o_ref[:, pl.ds(col, tv)] = logits

    # Finalize: subtract (max + log(sum exp)) chunk-by-chunk so temporaries are
    # bounded by tm*tv*4 bytes and stores stay lane-dense; the resident block
    # is written back to HBM exactly once per M tile.
    @pl.when(j == n_v - 1)
    def _():
        corr = m_sc[...] + jnp.log(l_sc[...])  # (tm, 1)

        def body(c, carry):
            cc = pl.multiple_of(c * tv, tv)
            o_ref[:, pl.ds(cc, tv)] = o_ref[:, pl.ds(cc, tv)] - corr
            return carry

        lax.fori_loop(0, n_v, body, 0, unroll=(n_v <= 8))


def _round_up(x, mult):
    return -(-x // mult) * mult


def _tpu_vmem_and_tile_prefs():
    """Per-core VMEM capacity and preferred (tm, tv) for the local TPU."""
    kind = ""
    try:
        kind = jax.devices()[0].device_kind.lower()
    except Exception:
        pass
    vmem_cap = None
    try:
        vmem_cap = int(getattr(pltpu.get_tpu_info(), "vmem_capacity_bytes", 0))
    except Exception:
        vmem_cap = None
    if not vmem_cap:
        if "v7" in kind:
            vmem_cap = 64 << 20
        elif "v4" in kind or "v5" in kind or "v6" in kind:
            vmem_cap = 128 << 20
        else:
            vmem_cap = 64 << 20  # conservative default

    if "v7" in kind:
        pref_tm, pref_tv = 512, 512    # rebalance the 64 MiB toward the M tile
    elif "v6" in kind:
        pref_tm, pref_tv = 512, 1024   # weight stream is HBM-bound -> large tm
    elif "v5" in kind:
        pref_tm, pref_tv = 256, 1024   # ~v5e machine balance at tm=256
    else:
        pref_tm, pref_tv = 256, 512
    return vmem_cap, pref_tm, pref_tv


def _vmem_footprint_bytes(tm, tv, vocab_p, d_model, x_bytes, w_bytes):
    """Conservative per-core VMEM estimate for a given tiling (double-buffered
    input/output blocks, stats scratch and the per-tile f32 temporaries)."""
    x_tiles = 2 * tm * d_model * x_bytes        # resident x tile (dbl-buffered)
    w_tiles = 2 * tv * d_model * w_bytes        # streamed weight tile
    b_tiles = 2 * 8 * tv * 4                    # bias row (sublane-padded)
    out_blk = 2 * tm * vocab_p * 4              # resident f32 logits row
    scratch = 2 * tm * 128 * 4                  # (tm,1) stats, lane-padded
    temps = 3 * tm * tv * 4                     # logits + exp + finalize chunk
    return x_tiles + w_tiles + b_tiles + out_blk + scratch + temps


def generator_forward(x, weight, bias, *, tm=None, tv=None):
    """x: [batch, seq, d_model]; weight: [vocab, d_model]; bias: [vocab].

    Returns log_softmax(x @ weight.T + bias, axis=-1) as f32,
    shape [batch, seq, vocab].
    """
    batch, seq, d_model = x.shape
    vocab = weight.shape[0]
    m = batch * seq

    vmem_cap, pref_tm, pref_tv = _tpu_vmem_and_tile_prefs()
    budget = int(0.8 * vmem_cap)

    # ---- tile selection (lane/sublane aligned, generation aware) ----------
    if tv is None:
        tv = min(pref_tv, _round_up(vocab, 128))
    tv = max(128, _round_up(tv, 128))
    if tm is None:
        tm = min(pref_tm, _round_up(m, 8))
    tm = max(8, _round_up(tm, 8))

    x_bytes = x.dtype.itemsize
    w_bytes = weight.dtype.itemsize

    def fits(tm_, tv_):
        return _vmem_footprint_bytes(tm_, tv_, _round_up(vocab, tv_), d_model,
                                     x_bytes, w_bytes) <= budget

    # Shrink tm first (the resident output row scales with tm * vocab), then tv.
    while not fits(tm, tv) and tm > 8:
        tm = max(8, _round_up(tm // 2, 8))
    while not fits(tm, tv) and tv > 128:
        tv = max(128, _round_up(tv // 2, 128))
    if not fits(tm, tv):
        need = _vmem_footprint_bytes(tm, tv, _round_up(vocab, tv), d_model,
                                     x_bytes, w_bytes)
        # TODO(synk): drop output residency for this regime (tile-wise output
        # + tiny per-row (max, lse) stats, normalize in a follow-up pass).
        raise ValueError(
            f"Generator Pallas kernel does not fit the per-core VMEM budget: "
            f"needs ~{need} bytes at tm={tm}, tv={tv}, budget={budget} bytes "
            f"(vocab={vocab}, d_model={d_model}).")

    # ---- padding for non-divisible shapes ----------------------------------
    vocab_p = _round_up(vocab, tv)
    m_p = _round_up(m, tm)

    x2d = x.reshape(m, d_model)
    if m_p != m:
        x2d = jnp.pad(x2d, ((0, m_p - m), (0, 0)))
    w_p, b_p = weight, bias
    if vocab_p != vocab:
        w_p = jnp.pad(weight, ((0, vocab_p - vocab), (0, 0)))
        # Padded vocab columns get a very negative bias so exp(.) == 0 and they
        # drop out of the log-sum-exp; they are sliced off the output below.
        b_p = jnp.pad(bias, ((0, vocab_p - vocab),), constant_values=-1e30)
    b2d = b_p.reshape(1, vocab_p)

    grid = (m_p // tm, vocab_p // tv)

    cost = pl.CostEstimate(
        flops=2 * m_p * d_model * vocab_p,
        transcendentals=m_p * vocab_p,
        bytes_accessed=(x2d.size * x_bytes
                        + w_p.size * w_bytes
                        + b2d.size * b_p.dtype.itemsize
                        + m_p * vocab_p * 4),
    )

    out = pl.pallas_call(
        _generator_kernel,
        out_shape=jax.ShapeDtypeStruct((m_p, vocab_p), jnp.float32),
        grid_spec=pltpu.PrefetchScalarGridSpec(
            num_scalar_prefetch=0,
            grid=grid,
            in_specs=[
                # x tile: depends only on the M index -> resident across vocab
                pl.BlockSpec((tm, d_model), lambda i, j: (i, 0)),
                # weight tile: streamed along vocab (kept [vocab, d_model])
                pl.BlockSpec((tv, d_model), lambda i, j: (j, 0)),
                # bias tile: depends only on the vocab index
                pl.BlockSpec((1, tv), lambda i, j: (0, j)),
            ],
            # Full vocab row per M tile, resident across the vocab axis,
            # written back to HBM once per M tile.
            out_specs=pl.BlockSpec((tm, vocab_p), lambda i, j: (i, 0)),
            scratch_shapes=[pltpu.VMEM((tm, 1), jnp.float32),   # running max
                            pltpu.VMEM((tm, 1), jnp.float32)],  # running lse
        ),
        compiler_params=pltpu.CompilerParams(
            dimension_semantics=("parallel", "arbitrary"),
            vmem_limit_bytes=budget,
        ),
        cost_estimate=cost,
    )(x2d, w_p, b2d)

    return out[:m, :vocab].reshape(batch, seq, vocab)


if __name__ == "__main__":
    # Small shapes consistent with the module's forward.
    batch, seq, d_model, vocab = 2, 8, 32, 256

    key = jax.random.PRNGKey(0)
    kx, kw, kb = jax.random.split(key, 3)

    # Deterministic parameter init mimicking nn.Linear default
    # (uniform(-1/sqrt(d_model), 1/sqrt(d_model))).
    bound = 1.0 / math.sqrt(d_model)
    weight = jax.random.uniform(kw, (vocab, d_model), jnp.float32, -bound, bound)
    bias = jax.random.uniform(kb, (vocab,), jnp.float32, -bound, bound)
    x = jax.random.normal(kx, (batch, seq, d_model), jnp.float32)

    # Small tiles here so the demo exercises a 2x2 grid, the online-LSE updates
    # and the chunked finalize.  At real shapes leave tm/tv=None
    # (generation-aware selection).
    out = generator_forward(x, weight, bias, tm=8, tv=128)
    out = jax.block_until_ready(out)

    ref = jax.nn.log_softmax(x @ weight.T + bias, axis=-1)
    assert out.shape == (batch, seq, vocab)
    assert jnp.allclose(out, ref, atol=1e-4, rtol=1e-4)
    # log_softmax rows must sum (in prob space) to ~1
    assert jnp.allclose(jnp.sum(jnp.exp(out), axis=-1), 1.0, atol=1e-4)

    # Non-divisible shapes: exercises the padding path (m and vocab padded,
    # padded vocab columns masked out of the log-sum-exp via a -1e30 bias).
    vocab2, seq2 = 250, 7
    w2 = jax.random.uniform(kw, (vocab2, d_model), jnp.float32, -bound, bound)
    b2 = jax.random.uniform(kb, (vocab2,), jnp.float32, -bound, bound)
    x2 = jax.random.normal(kx, (batch, seq2, d_model), jnp.float32)
    out2 = jax.block_until_ready(generator_forward(x2, w2, b2, tm=8, tv=128))
    ref2 = jax.nn.log_softmax(x2 @ w2.T + b2, axis=-1)
    assert out2.shape == (batch, seq2, vocab2)
    assert jnp.allclose(out2, ref2, atol=1e-4, rtol=1e-4)

    print("KERNEL_OK")
</pallas_src>

<mosaic_0001>
module attributes {stable_mosaic.version = 11 : i64} {
  func.func @_generator_kernel(%arg0: i32, %arg1: i32, %arg2: memref<8x32xf32, #tpu.memory_space<vmem>>, %arg3: memref<128x32xf32, #tpu.memory_space<vmem>>, %arg4: memref<1x128xf32, #tpu.memory_space<vmem>>, %arg5: memref<8x256xf32, #tpu.memory_space<vmem>>, %arg6: memref<8x1xf32, #tpu.memory_space<vmem>>, %arg7: memref<8x1xf32, #tpu.memory_space<vmem>>) attributes {dimension_semantics = [#tpu.dimension_semantics<parallel>, #tpu.dimension_semantics<arbitrary>], iteration_bounds = array<i64: 2, 2>, scalar_prefetch = 0 : i64, scratch_operands = 2 : i64, tpu.core_type = #tpu.core_type<tc>, window_params = [{transform_indices = @transform_0, window_bounds = array<i64: 8, 32>}, {transform_indices = @transform_1, window_bounds = array<i64: 128, 32>}, {transform_indices = @transform_2, window_bounds = array<i64: 1, 128>}, {transform_indices = @transform_3, window_bounds = array<i64: 8, 256>}]} {
    %c0_i32 = arith.constant 0 : i32
    %0 = arith.cmpi eq, %arg1, %c0_i32 : i32
    %1 = arith.extui %0 : i1 to i32
    %c0_i32_0 = arith.constant 0 : i32
    %2 = arith.cmpi ne, %1, %c0_i32_0 : i32
    scf.if %2 {
      %cst_18 = arith.constant 0xFF800000 : f32
      %32 = vector.broadcast %cst_18 : f32 to vector<8x1xf32>
      %c0_19 = arith.constant 0 : index
      %c0_20 = arith.constant 0 : index
      %33 = vector.load %arg6[%c0_19, %c0_20] : memref<8x1xf32, #tpu.memory_space<vmem>>, vector<8x1xf32>
      tpu.vector_store %arg6[%c0_19, %c0_20], %32 {strides = array<i32>} : memref<8x1xf32, #tpu.memory_space<vmem>>, vector<8x1xf32>,
      %cst_21 = arith.constant 0.000000e+00 : f32
      %34 = vector.broadcast %cst_21 : f32 to vector<8x1xf32>
      %c0_22 = arith.constant 0 : index
      %c0_23 = arith.constant 0 : index
      %35 = vector.load %arg7[%c0_22, %c0_23] : memref<8x1xf32, #tpu.memory_space<vmem>>, vector<8x1xf32>
      tpu.vector_store %arg7[%c0_22, %c0_23], %34 {strides = array<i32>} : memref<8x1xf32, #tpu.memory_space<vmem>>, vector<8x1xf32>,
    } else {
    }
    %c0 = arith.constant 0 : index
    %c0_1 = arith.constant 0 : index
    %3 = vector.load %arg2[%c0, %c0_1] : memref<8x32xf32, #tpu.memory_space<vmem>>, vector<8x32xf32>
    %c0_2 = arith.constant 0 : index
    %c0_3 = arith.constant 0 : index
    %4 = vector.load %arg3[%c0_2, %c0_3] : memref<128x32xf32, #tpu.memory_space<vmem>>, vector<128x32xf32>
    %cst = arith.constant dense<0.000000e+00> : vector<8x128xf32>
    %5 = tpu.matmul %3, %4, %cst {dimension_numbers = #tpu.dot_dimension_numbers<[1], [1], [0], [0], [0, 0, 1, 0], [], []>} : vector<8x32xf32>, vector<128x32xf32>, vector<8x128xf32> -> vector<8x128xf32>
    %c0_4 = arith.constant 0 : index
    %c0_5 = arith.constant 0 : index
    %6 = vector.load %arg4[%c0_4, %c0_5] : memref<1x128xf32, #tpu.memory_space<vmem>>, vector<1x128xf32>
    %7 = vector.broadcast %6 : vector<1x128xf32> to vector<8x128xf32>
    %8 = arith.addf %5, %7 : vector<8x128xf32>
    %c0_6 = arith.constant 0 : index
    %c0_7 = arith.constant 0 : index
    %9 = vector.load %arg6[%c0_6, %c0_7] : memref<8x1xf32, #tpu.memory_space<vmem>>, vector<8x1xf32>
    %cst_8 = arith.constant dense<0xFF800000> : vector<8xf32>
    %10 = vector.multi_reduction <maximumf>, %8, %cst_8 [1] : vector<8x128xf32> to vector<8xf32>
    %11 = vector.shape_cast %10 : vector<8xf32> to vector<8x1xf32>
    %12 = arith.maximumf %9, %11 : vector<8x1xf32>
    %c0_9 = arith.constant 0 : index
    %c0_10 = arith.constant 0 : index
    %13 = vector.load %arg7[%c0_9, %c0_10] : memref<8x1xf32, #tpu.memory_space<vmem>>, vector<8x1xf32>
    %14 = arith.subf %9, %12 : vector<8x1xf32>
    %15 = math.exp %14 : vector<8x1xf32>
    %16 = arith.mulf %13, %15 : vector<8x1xf32>
    %17 = vector.broadcast %12 : vector<8x1xf32> to vector<8x128xf32>
    %18 = arith.subf %8, %17 : vector<8x128xf32>
    %19 = math.exp %18 : vector<8x128xf32>
    %cst_11 = arith.constant dense<0.000000e+00> : vector<8xf32>
    %20 = vector.multi_reduction <add>, %19, %cst_11 [1] : vector<8x128xf32> to vector<8xf32>
    %21 = vector.shape_cast %20 : vector<8xf32> to vector<8x1xf32>
    %22 = arith.addf %16, %21 : vector<8x1xf32>
    %c0_12 = arith.constant 0 : index
    %c0_13 = arith.constant 0 : index
    %23 = vector.load %arg7[%c0_12, %c0_13] : memref<8x1xf32, #tpu.memory_space<vmem>>, vector<8x1xf32>
    tpu.vector_store %arg7[%c0_12, %c0_13], %22 {strides = array<i32>} : memref<8x1xf32, #tpu.memory_space<vmem>>, vector<8x1xf32>,
    %c0_14 = arith.constant 0 : index
    %c0_15 = arith.constant 0 : index
    %24 = vector.load %arg6[%c0_14, %c0_15] : memref<8x1xf32, #tpu.memory_space<vmem>>, vector<8x1xf32>
    tpu.vector_store %arg6[%c0_14, %c0_15], %12 {strides = array<i32>} : memref<8x1xf32, #tpu.memory_space<vmem>>, vector<8x1xf32>,
    %c128_i32 = arith.constant 128 : i32
    %25 = arith.muli %arg1, %c128_i32 : i32
    %26 = tpu.assume_multiple %25, 128 : i32
    %c0_16 = arith.constant 0 : index
    %27 = arith.index_cast %26 : i32 to index
    %28 = vector.load %arg5[%c0_16, %27] : memref<8x256xf32, #tpu.memory_space<vmem>>, vector<8x128xf32>
    tpu.vector_store %arg5[%c0_16, %27], %8 {strides = array<i32>} : memref<8x256xf32, #tpu.memory_space<vmem>>, vector<8x128xf32>,
    %c1_i32 = arith.constant 1 : i32
    %29 = arith.cmpi eq, %arg1, %c1_i32 : i32
    %30 = arith.extui %29 : i1 to i32
    %c0_i32_17 = arith.constant 0 : i32
    %31 = arith.cmpi ne, %30, %c0_i32_17 : i32
    scf.if %31 {
      %c0_18 = arith.constant 0 : index
      %c0_19 = arith.constant 0 : index
      %32 = vector.load %arg6[%c0_18, %c0_19] : memref<8x1xf32, #tpu.memory_space<vmem>>, vector<8x1xf32>
      %c0_20 = arith.constant 0 : index
      %c0_21 = arith.constant 0 : index
      %33 = vector.load %arg7[%c0_20, %c0_21] : memref<8x1xf32, #tpu.memory_space<vmem>>, vector<8x1xf32>
      %34 = math.log %33 : vector<8x1xf32>
      %35 = arith.addf %32, %34 : vector<8x1xf32>
      %c0_i32_22 = arith.constant 0 : i32
      %c128_i32_23 = arith.constant 128 : i32
      %36 = arith.muli %c0_i32_22, %c128_i32_23 : i32
      %37 = tpu.assume_multiple %36, 128 : i32
      %c0_24 = arith.constant 0 : index
      %38 = arith.index_cast %37 : i32 to index
      %39 = vector.load %arg5[%c0_24, %38] : memref<8x256xf32, #tpu.memory_space<vmem>>, vector<8x128xf32>
      %40 = vector.broadcast %35 : vector<8x1xf32> to vector<8x128xf32>
      %41 = arith.subf %39, %40 : vector<8x128xf32>
      %c0_25 = arith.constant 0 : index
      %42 = arith.index_cast %37 : i32 to index
      %43 = vector.load %arg5[%c0_25, %42] : memref<8x256xf32, #tpu.memory_space<vmem>>, vector<8x128xf32>
      tpu.vector_store %arg5[%c0_25, %42], %41 {strides = array<i32>} : memref<8x256xf32, #tpu.memory_space<vmem>>, vector<8x128xf32>,
      %c1_i32_26 = arith.constant 1 : i32
      %c128_i32_27 = arith.constant 128 : i32
      %44 = arith.muli %c1_i32_26, %c128_i32_27 : i32
      %45 = tpu.assume_multiple %44, 128 : i32
      %c0_28 = arith.constant 0 : index
      %46 = arith.index_cast %45 : i32 to index
      %47 = vector.load %arg5[%c0_28, %46] : memref<8x256xf32, #tpu.memory_space<vmem>>, vector<8x128xf32>
      %48 = vector.broadcast %35 : vector<8x1xf32> to vector<8x128xf32>
      %49 = arith.subf %47, %48 : vector<8x128xf32>
      %c0_29 = arith.constant 0 : index
      %50 = arith.index_cast %45 : i32 to index
      %51 = vector.load %arg5[%c0_29, %50] : memref<8x256xf32, #tpu.memory_space<vmem>>, vector<8x128xf32>
      tpu.vector_store %arg5[%c0_29, %50], %49 {strides = array<i32>} : memref<8x256xf32, #tpu.memory_space<vmem>>, vector<8x128xf32>,
      %c2_i32 = arith.constant 2 : i32
    } else {
    }
    return
  }
  func.func @transform_0(%arg0: i32, %arg1: i32) -> (i32, i32) {
    %c0_i32 = arith.constant 0 : i32
    %c0_i32_0 = arith.constant 0 : i32
    return %arg0, %c0_i32 : i32, i32
  }
  func.func @transform_1(%arg0: i32, %arg1: i32) -> (i32, i32) {
    %c0_i32 = arith.constant 0 : i32
    %c0_i32_0 = arith.constant 0 : i32
    return %arg1, %c0_i32 : i32, i32
  }
  func.func @transform_2(%arg0: i32, %arg1: i32) -> (i32, i32) {
    %c0_i32 = arith.constant 0 : i32
    %c0_i32_0 = arith.constant 0 : i32
    return %c0_i32, %arg1 : i32, i32
  }
  func.func @transform_3(%arg0: i32, %arg1: i32) -> (i32, i32) {
    %c0_i32 = arith.constant 0 : i32
    %c0_i32_0 = arith.constant 0 : i32
    return %arg0, %c0_i32 : i32, i32
  }
}

</mosaic_0001>

<llo_original>
// kernel: tpu_custom_call.1
$region0: #{tpu_custom_call.1}
  #allocation0 [shape = 'u32[]', space=smem, size = 0x4, offset = 0x4, fixed_abs, tag = 'smem constant byte address 0x4 - core index']
  #allocation1 [shape = 'u32[144,128]{1,0:T(1,128)}', space=vmem, size = 0x12000, scoped, tag = 'internal scratch']
  #allocation2 [shape = 'f32[8,1]{1,0:T(8,128)}', space=vmem, size = 0x1000, scoped, tag = 'scratch operand']
  #allocation3 [shape = 'f32[8,1]{1,0:T(8,128)}', space=vmem, size = 0x1000, scoped, tag = 'scratch operand']
  %s0 = inlined_call_operand.vmem [shape: f32[16,32], index: 0, kind: input, shape index: {}]
  %s1 = inlined_call_operand.vmem [shape: f32[256,32], index: 1, kind: input, shape index: {}]
  %s2 = inlined_call_operand.vmem [shape: f32[1,256], index: 2, kind: input, shape index: {}]
  %s3 = inlined_call_operand.hbm [shape: f32[16,256], index: 3, kind: output, shape index: {}]
  %s4 = sld [smem:[#allocation0]]
  $region53: #{tpu_custom_call.1} parent=0
    _
  %s6 = ssub.s32 1, %s4
  %s7 = scalar_select 0, %s6, %s4
  $region1: #{tpu_custom_call.1} parent=0
    #allocation4 [shape = 'u8[16384]{0}', space=vmem, size = 0x4000, scoped, tag = 'output window, operand 0']
    #allocation5 [shape = 's32[2]{0}', space=sflag, size = 0x8, scoped, tag = 'scoped memory for tpu_custom_call.1']
    %8 = vsyncpa [#allocation5], 0
    %s9 = scalar_lea.sflag [#allocation5], 1
    %10 = vsyncpa %s9, 0
    loop: start=0, step=1, limit=6
    $region2: #{tpu_custom_call.1} parent=1 // loop_pre_header
      _
    $region3: #{tpu_custom_call.1} parent=1 // loop_header
      %s12 = sphi 0, %s16
      %p13 = scmp.ge.s32.totalorder %s12, 6
      %s19 = sphi 0, %s31
      %s20 = sphi 0, %s27
      %s21 = sphi 0, %s19
      %s22 = sphi 0, %s20
      %s23 = sphi 0, %s21
      %s24 = sphi 0, %s22
      %s34 = sphi 0, %s36
      %s37 = sphi 0, %s34
      %s38 = sphi 0, %s37
      %s54 = sphi 0, %s38
      %s60 = sphi 0, %s62
      %s63 = sphi 0, %s60
      %s64 = sphi 0, %s63
      %s80 = sphi 0, %s64
      %s86 = sphi 0, %s88
      %s89 = sphi 0, %s86
      %s90 = sphi 0, %s89
      %s106 = sphi 0, %s90
      %s112 = sphi 0, %s114
      %s115 = sphi 0, %s112
      %s116 = sphi 0, %s115
      %s132 = sphi 0, %s116
    $region4: #{tpu_custom_call.1} parent=1 // loop_header_branch
      %15 = sbr.rel (%p13) target = $region8
    $region5: #{tpu_custom_call.1} parent=1 // loop_body
      %s17 = ssub.s32 %s12, 1
      %s18 = ssub.s32 %s12, 2
      %s25 = sadd.s32 1, %s20
      %p26 = scmp.ge.s32.totalorder %s25, 2
      %s27 = scalar_select %p26, 0, %s25
      %s28 = sadd.s32 1, %s19
      %s29 = scalar_select %p26, %s28, %s19
      %p30 = scmp.ge.s32.totalorder %s29, 2
      %s31 = scalar_select %p30, 0, %s29
      %s32 = ssub.s32 %s19, %s31
      %p33 = scmp.eq.s32.totalorder %s32, 0
      %s35 = sadd.s32 %s34, 1
      %s36 = scalar_select %p33, %s34, %s35
      %p39 = pneg %p33
      %p40 = scmp.eq.s32.totalorder %s12, 3
      %p41 = por %p39, %p40
      %p42 = scmp.ne.s32.totalorder %s34, %s37
      %p43 = scmp.eq.s32.totalorder %s12, 0
      %p44 = por %p42, %p43
      %p45 = scmp.ne.s32.totalorder %s34, %s37
      %p46 = scmp.eq.s32.totalorder %s17, 3
      %p47 = por %p45, %p46
      %p48 = scmp.ne.s32.totalorder %s37, %s38
      %p49 = scmp.eq.s32.totalorder %s17, 0
      %p50 = por %p48, %p49
      %p51 = scmp.ne.s32.totalorder %s37, %s38
      %p52 = scmp.eq.s32.totalorder %s18, 3
      %p53 = por %p51, %p52
      %p55 = scmp.ne.s32.totalorder %s38, %s54
      %p56 = scmp.eq.s32.totalorder %s18, 0
      %p57 = por %p55, %p56
      %s58 = ssub.s32 %s20, %s27
      %p59 = scmp.eq.s32.totalorder %s58, 0
      %s61 = sadd.s32 %s60, 1
      %s62 = scalar_select %p59, %s60, %s61
      %p65 = pneg %p59
      %p66 = scmp.eq.s32.totalorder %s12, 3
      %p67 = por %p65, %p66
      %p68 = scmp.ne.s32.totalorder %s60, %s63
      %p69 = scmp.eq.s32.totalorder %s12, 0
      %p70 = por %p68, %p69
      %p71 = scmp.ne.s32.totalorder %s60, %s63
      %p72 = scmp.eq.s32.totalorder %s17, 3
      %p73 = por %p71, %p72
      %p74 = scmp.ne.s32.totalorder %s63, %s64
      %p75 = scmp.eq.s32.totalorder %s17, 0
      %p76 = por %p74, %p75
      %p77 = scmp.ne.s32.totalorder %s63, %s64
      %p78 = scmp.eq.s32.totalorder %s18, 3
      %p79 = por %p77, %p78
      %p81 = scmp.ne.s32.totalorder %s64, %s80
      %p82 = scmp.eq.s32.totalorder %s18, 0
      %p83 = por %p81, %p82
      %s84 = ssub.s32 %s20, %s27
      %p85 = scmp.eq.s32.totalorder %s84, 0
      %s87 = sadd.s32 %s86, 1
      %s88 = scalar_select %p85, %s86, %s87
      %p91 = pneg %p85
      %p92 = scmp.eq.s32.totalorder %s12, 3
      %p93 = por %p91, %p92
      %p94 = scmp.ne.s32.totalorder %s86, %s89
      %p95 = scmp.eq.s32.totalorder %s12, 0
      %p96 = por %p94, %p95
      %p97 = scmp.ne.s32.totalorder %s86, %s89
      %p98 = scmp.eq.s32.totalorder %s17, 3
      %p99 = por %p97, %p98
      %p100 = scmp.ne.s32.totalorder %s89, %s90
      %p101 = scmp.eq.s32.totalorder %s17, 0
      %p102 = por %p100, %p101
      %p103 = scmp.ne.s32.totalorder %s89, %s90
      %p104 = scmp.eq.s32.totalorder %s18, 3
      %p105 = por %p103, %p104
      %p107 = scmp.ne.s32.totalorder %s90, %s106
      %p108 = scmp.eq.s32.totalorder %s18, 0
      %p109 = por %p107, %p108
      %s110 = ssub.s32 %s19, %s31
      %p111 = scmp.eq.s32.totalorder %s110, 0
      %s113 = sadd.s32 %s112, 1
      %s114 = scalar_select %p111, %s112, %s113
      %p117 = pneg %p111
      %p118 = scmp.eq.s32.totalorder %s12, 3
      %p119 = por %p117, %p118
      %p120 = scmp.ne.s32.totalorder %s112, %s115
      %p121 = scmp.eq.s32.totalorder %s12, 0
      %p122 = por %p120, %p121
      %p123 = scmp.ne.s32.totalorder %s112, %s115
      %p124 = scmp.eq.s32.totalorder %s17, 3
      %p125 = por %p123, %p124
      %p126 = scmp.ne.s32.totalorder %s115, %s116
      %p127 = scmp.eq.s32.totalorder %s17, 0
      %p128 = por %p126, %p127
      %p129 = scmp.ne.s32.totalorder %s115, %s116
      %p130 = scmp.eq.s32.totalorder %s18, 3
      %p131 = por %p129, %p130
      %p133 = scmp.ne.s32.totalorder %s116, %s132
      %p134 = scmp.eq.s32.totalorder %s18, 0
      %p135 = por %p133, %p134
      %p136 = scmp.le.s32.totalorder 1, %s12
      %p137 = scmp.lt.s32.totalorder %s12, 5
      %p138 = pnand %p136, %p137
      %p139 = pneg %p138
      // Predicated region
      $region9: #{tpu_custom_call.1} parent=5 // pred_check
        _
      $region10: #{tpu_custom_call.1} parent=5 // pred_check_branch
        %141 = sbr.rel (%p138) target = $region12
      $region11: #{tpu_custom_call.1} parent=5 // pred_region
        %s142 = ssub.s32 %s12, 1
      $region12: #{tpu_custom_call.1} parent=5 // pred_fallthru
        _
      %p143 = scmp.lt.s32.totalorder %s12, 4
      // Predicated region
      $region13: #{tpu_custom_call.1} parent=5 // pred_check
        %p144 = pneg %p143
      $region14: #{tpu_custom_call.1} parent=5 // pred_check_branch
        %146 = sbr.rel (%p144) target = $region16
      $region15: #{tpu_custom_call.1} parent=5 // pred_region
        // Predicated region
        $region17: #{tpu_custom_call.1} parent=15 // pred_check
          %p147 = pneg %p44
        $region18: #{tpu_custom_call.1} parent=15 // pred_check_branch
          %149 = sbr.rel (%p147) target = $region20
        $region19: #{tpu_custom_call.1} parent=15 // pred_region
          %p150 = scmp.lt.s32.totalorder %s19, 1
          %s151 = scalar_select %p150, %s19, 1
          %s152 = smul.addr %s151, 8
          %s153 = scalar_lea.vmem %s0, %s152
        $region20: #{tpu_custom_call.1} parent=15 // pred_fallthru
          _
        // Predicated region
        $region21: #{tpu_custom_call.1} parent=15 // pred_check
          %p154 = pneg %p70
        $region22: #{tpu_custom_call.1} parent=15 // pred_check_branch
          %156 = sbr.rel (%p154) target = $region24
        $region23: #{tpu_custom_call.1} parent=15 // pred_region
          %s157 = smul.u32 16, %s20
          %p158 = scmp.lt.s32.totalorder %s157, 31
          %s159 = scalar_select %p158, %s157, 31
          %s160 = smul.addr %s159, 8
          %s161 = scalar_lea.vmem %s1, %s160
          %s162 = smul.u32 16, %s20
        $region24: #{tpu_custom_call.1} parent=15 // pred_fallthru
          _
        // Predicated region
        $region25: #{tpu_custom_call.1} parent=15 // pred_check
          %p163 = pneg %p96
        $region26: #{tpu_custom_call.1} parent=15 // pred_check_branch
          %165 = sbr.rel (%p163) target = $region28
        $region27: #{tpu_custom_call.1} parent=15 // pred_region
          %p166 = scmp.lt.s32.totalorder %s20, 1
          %s167 = scalar_select %p166, %s20, 1
          %s168 = scalar_lea.vmem %s2, %s167
        $region28: #{tpu_custom_call.1} parent=15 // pred_fallthru
          _
      $region16: #{tpu_custom_call.1} parent=5 // pred_fallthru
        _
      %p169 = scmp.le.s32.totalorder 1, %s12
      %p170 = scmp.lt.s32.totalorder %s12, 5
      %p171 = pnand %p169, %p170
      %p172 = pneg %p171
      // Predicated region
      $region29: #{tpu_custom_call.1} parent=5 // pred_check
        _
      $region30: #{tpu_custom_call.1} parent=5 // pred_check_branch
        %174 = sbr.rel (%p171) target = $region32
      $region31: #{tpu_custom_call.1} parent=5 // pred_region
        %s175 = ssub.s32 %s12, 1
        %p176 = scmp.lt.s32.totalorder %s21, 1
        %s177 = scalar_select %p176, %s21, 1
        %s178 = smul.addr %s177, 8
        %s179 = scalar_lea.vmem %s0, %s178
        %p180 = pneg %p50
        %p181 = pneg %p47
        %s182 = smul.u32 16, %s22
        %p183 = scmp.lt.s32.totalorder %s182, 31
        %s184 = scalar_select %p183, %s182, 31
        %s185 = smul.addr %s184, 8
        %s186 = scalar_lea.vmem %s1, %s185
        %p187 = pneg %p76
        %p188 = pneg %p73
        %p189 = scmp.lt.s32.totalorder %s22, 1
        %s190 = scalar_select %p189, %s22, 1
        %s191 = scalar_lea.vmem %s2, %s190
        %p192 = pneg %p102
        %p193 = pneg %p99
        %p194 = pneg %p128
        %p195 = pneg %p125
        %s196 = sand.u32 %s115, 1
        %s197 = scalar_lea.sflag [#allocation5], %s196
        %s198 = sand.u32 %s115, 1
        %s199 = smul.addr %s198, 16
        %s200 = scalar_lea.vmem [#allocation4], %s199
        %p201 = scmp.lt.s32.totalorder %s21, 1
        %s202 = scalar_select %p201, %s21, 1
        %s203 = smul.addr %s202, 8
        %s204 = scalar_lea.vmem %s0, %s203
        %s205 = smul.u32 16, %s22
        %p206 = scmp.lt.s32.totalorder %s205, 31
        %s207 = scalar_select %p206, %s205, 31
        %s208 = smul.addr %s207, 8
        %s209 = scalar_lea.vmem %s1, %s208
        %s210 = smul.u32 16, %s22
        %p211 = scmp.lt.s32.totalorder %s22, 1
        %s212 = scalar_select %p211, %s22, 1
        %s213 = scalar_lea.vmem %s2, %s212
        %p214 = scmp.eq.s32.totalorder %s22, 0
        // Predicated region
        $region33: #{tpu_custom_call.1} parent=31 // pred_check
          %p215 = pneg %p214
        $region34: #{tpu_custom_call.1} parent=31 // pred_check_branch
          %217 = sbr.rel (%p215) target = $region36
        $region35: #{tpu_custom_call.1} parent=31 // pred_region
          %vm218 = vcmask 7168
          %219 = vst.msk [vmem:[#allocation2] sm:$0xff] %vm218, -inf
          %220 = vst.msk [vmem:[#allocation3] sm:$0xff] %vm218, 0.0
        $region36: #{tpu_custom_call.1} parent=31 // pred_fallthru
          _
        %v221 = vld [vmem:[%s204] sm:$0xff]
        %v222 = vld [vmem:[%s209] sm:$0xff]
        %v223 = vld [vmem:[%s209 + $0x8] sm:$0xff]
        %v224 = vld [vmem:[%s209 + $0x10] sm:$0xff]
        %v225 = vld [vmem:[%s209 + $0x18] sm:$0xff]
        %v226 = vld [vmem:[%s209 + $0x20] sm:$0xff]
        %v227 = vld [vmem:[%s209 + $0x28] sm:$0xff]
        %v228 = vld [vmem:[%s209 + $0x30] sm:$0xff]
        %v229 = vld [vmem:[%s209 + $0x38] sm:$0xff]
        %v230 = vld [vmem:[%s209 + $0x40] sm:$0xff]
        %v231 = vld [vmem:[%s209 + $0x48] sm:$0xff]
        %v232 = vld [vmem:[%s209 + $0x50] sm:$0xff]
        %v233 = vld [vmem:[%s209 + $0x58] sm:$0xff]
        %v234 = vld [vmem:[%s209 + $0x60] sm:$0xff]
        %v235 = vld [vmem:[%s209 + $0x68] sm:$0xff]
        %v236 = vld [vmem:[%s209 + $0x70] sm:$0xff]
        %v237 = vld [vmem:[%s209 + $0x78] sm:$0xff]
        %v238 = vld [vmem:[%s213] sm:$0x1]
        %v240 = vlaneseq
        %v241 = vshrl.u32 %v240, 7
        %v242 = vsub.s32 0, %v241
        %v243 = vrot.slane %v238, %v242
        %vm245 = vcmask 261120
        %v247 = vsel %vm245, %v221, 0
        %v250 = vsel %vm245, %v222, 0
        %v253 = vsel %vm245, %v223, 0
        %v256 = vsel %vm245, %v224, 0
        %v259 = vsel %vm245, %v225, 0
        %v262 = vsel %vm245, %v226, 0
        %v265 = vsel %vm245, %v227, 0
        %v268 = vsel %vm245, %v228, 0
        %v271 = vsel %vm245, %v229, 0
        %v274 = vsel %vm245, %v230, 0
        %v277 = vsel %vm245, %v231, 0
        %v280 = vsel %vm245, %v232, 0
        %v283 = vsel %vm245, %v233, 0
        %v286 = vsel %vm245, %v234, 0
        %v289 = vsel %vm245, %v235, 0
        %v292 = vsel %vm245, %v236, 0
        %v295 = vsel %vm245, %v237, 0
        %297 = vmatprep.subr.mxu0 0.0
        %298 = vmatpush1.xpose.msra.mxu0 %v250
        %299 = vmatprep.subr.mxu0 0.0
        %300 = vmatpush1.xpose.msra.mxu0 %v253
        %301 = vmatprep.subr.mxu0 0.0
        %302 = vmatpush1.xpose.msra.mxu0 %v256
        %303 = vmatprep.subr.mxu0 0.0
        %304 = vmatpush1.xpose.msra.mxu0 %v259
        %305 = vmatprep.subr.mxu0 0.0
        %306 = vmatpush1.xpose.msra.mxu0 %v262
        %307 = vmatprep.subr.mxu0 0.0
        %308 = vmatpush1.xpose.msra.mxu0 %v265
        %309 = vmatprep.subr.mxu0 0.0
        %310 = vmatpush1.xpose.msra.mxu0 %v268
        %311 = vmatprep.subr.mxu0 0.0
        %312 = vmatpush1.xpose.msra.mxu0 %v271
        %313 = vmatprep.subr.mxu0 0.0
        %314 = vmatpush1.xpose.msra.mxu0 %v274
        %315 = vmatprep.subr.mxu0 0.0
        %316 = vmatpush1.xpose.msra.mxu0 %v277
        %317 = vmatprep.subr.mxu0 0.0
        %318 = vmatpush1.xpose.msra.mxu0 %v280
        %319 = vmatprep.subr.mxu0 0.0
        %320 = vmatpush1.xpose.msra.mxu0 %v283
        %321 = vmatprep.subr.mxu0 0.0
        %322 = vmatpush1.xpose.msra.mxu0 %v286
        %323 = vmatprep.subr.mxu0 0.0
        %324 = vmatpush1.xpose.msra.mxu0 %v289
        %325 = vmatprep.subr.mxu0 0.0
        %326 = vmatpush1.xpose.msra.mxu0 %v292
        %327 = vmatprep.subr.mxu0 0.0
        %328 = vmatpush1.xpose.msra.mxu0 %v295
        %329 = vmatprep.subr.mxu0 0.0
        %330 = vmatpush1.xpose.msra.mxu0 0.0
        %331 = vmatprep.subr.mxu0 0.0
        %332 = vmatpush1.xpose.msra.mxu0 0.0
        %333 = vmatprep.subr.mxu0 0.0
        %334 = vmatpush1.xpose.msra.mxu0 0.0
        %335 = vmatprep.subr.mxu0 0.0
        %336 = vmatpush1.xpose.msra.mxu0 0.0
        %337 = vmatprep.subr.mxu0 0.0
        %338 = vmatpush1.xpose.msra.mxu0 0.0
        %339 = vmatprep.subr.mxu0 0.0
        %340 = vmatpush1.xpose.msra.mxu0 0.0
        %341 = vmatprep.subr.mxu0 0.0
        %342 = vmatpush1.xpose.msra.mxu0 0.0
        %343 = vmatprep.subr.mxu0 0.0
        %344 = vmatpush1.xpose.msra.mxu0 0.0
        %345 = vmatprep.subr.mxu0 0.0
        %346 = vmatpush1.xpose.msra.mxu0 0.0
        %347 = vmatprep.subr.mxu0 0.0
        %348 = vmatpush1.xpose.msra.mxu0 0.0
        %349 = vmatprep.subr.mxu0 0.0
        %350 = vmatpush1.xpose.msra.mxu0 0.0
        %351 = vmatprep.subr.mxu0 0.0
        %352 = vmatpush1.xpose.msra.mxu0 0.0
        %353 = vmatprep.subr.mxu0 0.0
        %354 = vmatpush1.xpose.msra.mxu0 0.0
        %355 = vmatprep.subr.mxu0 0.0
        %356 = vmatpush1.xpose.msra.mxu0 0.0
        %357 = vmatprep.subr.mxu0 0.0
        %358 = vmatpush1.xpose.msra.mxu0 0.0
        %359 = vmatprep.subr.mxu0 0.0
        %360 = vmatpush1.xpose.msra.mxu0 0.0
        %361 = vmatprep.mubr.f32.mxu0 0.0
        %362 = vmatmul.mubr.f32.gmra.mrb[0].mxu0 %v247
        %v363 = vpop.f32.mrb[0].mxu0
        %v364 = vadd.f32 %v243, %v363
        %v365 = vpop.f32.mrb[0].mxu0
        %366 = vdwg.mxu0
        %v367 = vld [vmem:[#allocation2] sm:$0xff]
        %368 = vmax.xlane.f32.xlu0 %v364
        %v369 = vpop.xlane.xlu0 %368
        %v370 = vmax.f32 %v367, %v369
        %v371 = vld [vmem:[#allocation3] sm:$0xff]
        %v372 = vsub.f32 %v367, %v370
        %v373 = vmul.f32 %v372, 1.442695
        %v374 = vpow.pop %v373
        %v375 = vmul.f32 %v371, %v374
        %377 = vset.pattern.permute.xlu0 0
        %378 = vperm.xlu0 %377, %v370
        %v379 = vpop.permute.xlu0 %378
        %v381 = vsub.f32 %v364, %v379
        %v382 = vmul.f32 %v381, 1.442695
        %v383 = vpow.pop %v382
        %384 = vadd.xlane.f32.xlu0 %v383
        %v385 = vpop.xlane.xlu0 %384
        %v386 = vadd.f32 %v375, %v385
        %vm387 = vcmask 7168
        %388 = vst.msk [vmem:[#allocation3] sm:$0xff] %vm387, %v386
        %389 = vst.msk [vmem:[#allocation2] sm:$0xff] %vm387, %v370
        %s390 = smul.u32 %s22, 128
        %s391 = sshra.s32 %s390, 7
        %s392 = sand.u32 %s390, 127
        %s393 = smul.addr %s391, 8
        %s394 = scalar_lea.vmem %s200, %s393 [#allocation4]
        %395 = vst [vmem:[%s394] sm:$0xff] %v364
        %p396 = scmp.eq.s32.totalorder %s22, 1
        // Predicated region
        $region37: #{tpu_custom_call.1} parent=31 // pred_check
          %p397 = pneg %p396
        $region38: #{tpu_custom_call.1} parent=31 // pred_check_branch
          %399 = sbr.rel (%p397) target = $region40
        $region39: #{tpu_custom_call.1} parent=31 // pred_region
          %v400 = vld [vmem:[#allocation2] sm:$0xff]
          %v401 = vld [vmem:[#allocation3] sm:$0xff]
          %v402 = vlog2.pop %v401
          %v403 = vmul.f32 %v402, 0.6931472
          %v404 = vadd.f32 %v400, %v403
          %v405 = vld [vmem:[%s200] sm:$0xff]
          %407 = vset.pattern.permute.xlu0 0
          %408 = vperm.xlu0 %407, %v404
          %v409 = vpop.permute.xlu0 %408
          %v411 = vsub.f32 %v405, %v409
          %412 = vst [vmem:[%s200] sm:$0xff] %v411
          %s413 = scalar_lea.vmem %s200, 8 [#allocation4]
          %v414 = vld [vmem:[%s413] sm:$0xff]
          %v415 = vsub.f32 %v414, %v409
          %416 = vst [vmem:[%s413] sm:$0xff] %v415
        $region40: #{tpu_custom_call.1} parent=31 // pred_fallthru
          _
        %s417 = sand.u32 %s115, 1
        %s418 = scalar_lea.sflag [#allocation5], %s417
        %s419 = sand.u32 %s115, 1
        %s420 = smul.addr %s419, 16
        %s421 = scalar_lea.vmem [#allocation4], %s420
        // Predicated region
        $region41: #{tpu_custom_call.1} parent=31 // pred_check
          %p422 = pneg %p125
        $region42: #{tpu_custom_call.1} parent=31 // pred_check_branch
          %424 = sbr.rel (%p422) target = $region44
        $region43: #{tpu_custom_call.1} parent=31 // pred_region
          %s426 = ssub.s32 256, 256
          %427 = vsyncadd %s418, %s426
          %s428 = smul.addr %s21, 2
          %s429 = smul.addr %s428, 128
          %s430 = scalar_lea.hbm %s3, %s429
          %s432 = sshll.u32 %s421, 4
          %s433 = int_to_ptr.vmem [resolvable:$true] %s432
          %435 = dma.vmem_to_hbm [thread:$0]  %s433, 256, %s430, %s418
        $region44: #{tpu_custom_call.1} parent=31 // pred_fallthru
          _
      $region32: #{tpu_custom_call.1} parent=5 // pred_fallthru
        _
      %p436 = scmp.le.s32.totalorder 2, %s12
      // Predicated region
      $region45: #{tpu_custom_call.1} parent=5 // pred_check
        %p437 = pneg %p436
      $region46: #{tpu_custom_call.1} parent=5 // pred_check_branch
        %439 = sbr.rel (%p437) target = $region48
      $region47: #{tpu_custom_call.1} parent=5 // pred_region
        %s440 = ssub.s32 %s12, 2
        // Predicated region
        $region49: #{tpu_custom_call.1} parent=47 // pred_check
          %p441 = pneg %p131
        $region50: #{tpu_custom_call.1} parent=47 // pred_check_branch
          %443 = sbr.rel (%p441) target = $region52
        $region51: #{tpu_custom_call.1} parent=47 // pred_region
          %s444 = sand.u32 %s116, 1
          %s445 = scalar_lea.sflag [#allocation5], %s444
          %s446 = sand.u32 %s116, 1
          %s447 = smul.addr %s446, 16
          %s448 = scalar_lea.vmem [#allocation4], %s447
          %449 = dma.done %s445, 256
        $region52: #{tpu_custom_call.1} parent=47 // pred_fallthru
          _
      $region48: #{tpu_custom_call.1} parent=5 // pred_fallthru
        _
    $region6: #{tpu_custom_call.1} parent=1 // loop_footer
      %s16 = sadd.s32 1, %s12
    $region7: #{tpu_custom_call.1} parent=1 // loop_footer_branch
      %11 = sbr.rel target = $region3
    $region8: #{tpu_custom_call.1} parent=1 // loop_exit
      _
    %450 = vsyncpa [#allocation5], 1
    %s451 = scalar_lea.sflag [#allocation5], 1
    %452 = vsyncpa %s451, 1

</llo_original>
